<compile_context>
chip_gen: v5e
topology: v5e:2x2
jax: 0.10.0
libtpu: 0.0.40
codegen_flags: <defaults>
</compile_context>

<pallas_src>
import functools

import jax
import jax.numpy as jnp
from jax.experimental import pallas as pl
from jax.experimental.pallas import tpu as pltpu

_VMEM = pltpu.MemorySpace.VMEM
_SMEM = pltpu.MemorySpace.SMEM

_OUT_ROWS = 8     # sublane-aligned scalar slab per grid step
_OUT_LANES = 128  # lane-dense store


# -----------------------------------------------------------------------------
# In-kernel helpers (traced inside the kernel bodies)
# -----------------------------------------------------------------------------
def _norm_rows(x):
    """F.normalize(x) == x / max(||x||, 1e-12), via EUP rsqrt (no VALU divide)."""
    x = x.astype(jnp.float32)
    inv = jax.lax.rsqrt(jnp.sum(x * x, axis=-1, keepdims=True))
    inv = jnp.minimum(inv, 1e12)          # handles ||x|| < 1e-12 (incl. 0)
    return x * inv


def _bidir_ce_acc(logits):
    """CE loss + top-1 accuracy against labels=arange along BOTH axes of one
    (B,B) logits matrix (rows = "image" direction, cols = "text" direction,
    i.e. the transposed logits without materializing a transpose).
    Also returns row-/col-wise log-softmax for soft-target CE reuse."""
    bsz = logits.shape[0]
    inv_b = 1.0 / bsz

    row_idx = jax.lax.broadcasted_iota(jnp.int32, logits.shape, 0)
    col_idx = jax.lax.broadcasted_iota(jnp.int32, logits.shape, 1)
    diag_sum = jnp.sum(jnp.where(row_idx == col_idx, logits, 0.0))

    m_r = jnp.max(logits, axis=1, keepdims=True)
    lse_r = m_r + jnp.log(jnp.sum(jnp.exp(logits - m_r), axis=1, keepdims=True))
    m_c = jnp.max(logits, axis=0, keepdims=True)
    lse_c = m_c + jnp.log(jnp.sum(jnp.exp(logits - m_c), axis=0, keepdims=True))

    ce_rows = (jnp.sum(lse_r) - diag_sum) * inv_b
    ce_cols = (jnp.sum(lse_c) - diag_sum) * inv_b

    # first-occurrence argmax == index  (top-1 accuracy, both directions)
    big = jnp.int32(bsz)
    pred_r = jnp.min(jnp.where(logits == m_r, col_idx, big), axis=1,
                     keepdims=True)                       # (B,1)
    acc_rows = 100.0 * jnp.sum(
        (pred_r == row_idx[:, :1]).astype(jnp.float32)) * inv_b
    pred_c = jnp.min(jnp.where(logits == m_c, row_idx, big), axis=0,
                     keepdims=True)                       # (1,B)
    acc_cols = 100.0 * jnp.sum(
        (pred_c == col_idx[:1, :]).astype(jnp.float32)) * inv_b

    logp_r = logits - lse_r
    logp_c = logits - lse_c
    return ce_rows, ce_cols, acc_rows, acc_cols, logp_r, logp_c


# -----------------------------------------------------------------------------
# Kernel 1: global CLIP loss / accuracy (single invocation, no grid)
# -----------------------------------------------------------------------------
def _global_clip_kernel(scale_ref, zi_ref, zt_ref, out_ref):
    scale = scale_ref[0]
    zi = _norm_rows(zi_ref[...]).astype(jnp.bfloat16)     # fused L2-norm + bf16
    zt = _norm_rows(zt_ref[...]).astype(jnp.bfloat16)
    logits = scale * jax.lax.dot_general(
        zi, zt, (((1,), (1,)), ((), ())), preferred_element_type=jnp.float32)
    ce_r, ce_c, acc_r, acc_c, _, _ = _bidir_ce_acc(logits)
    out_ref[0] = ce_r     # clip_loss_image_global
    out_ref[1] = ce_c     # clip_loss_text_global
    out_ref[2] = acc_r    # clip_acc_image_global
    out_ref[3] = acc_c    # clip_acc_text_global


# -----------------------------------------------------------------------------
# Kernel 2: all local-aug-pair work on a (num_augs, num_augs) grid.
# Grid step (a, b) computes, entirely in VMEM (nothing but scalars hit HBM):
#   S   = n_img[a]   @ n_txt[b].T         (logits matrix of this pair)
#   S_c = n_img[1-a] @ n_txt[1-b].T       (cross pair -> Sinkhorn targets)
#   * CLIP local CE/acc over rows AND columns of scale*S
#   * T_row = sinkhorn_knopp(S_c)        (transpose-free: col-norm then row-norm)
#   * T_col = sinkhorn_knopp(S_c.T).T    (transpose-free: row-norm then col-norm)
#   * SwALIP soft CE:  image term uses row log-softmax of scale*S with T_row,
#                      text  term uses col log-softmax of scale*S with T_col.
# Summing the per-step image+text terms over all 4 steps reproduces exactly the
# reference double loop with (t1, t2) = (1-l1, 1-l2).
# -----------------------------------------------------------------------------
def _local_pairs_kernel(hscale_ref, himg_ref, htxt_ref, out_ref, *,
                        sk_iters, eps, world_size):
    a = pl.program_id(0)
    b = pl.program_id(1)
    ca = 1 - a
    cb = 1 - b

    scale = hscale_ref[0]
    bsz = himg_ref.shape[1]
    inv_b = 1.0 / bsz

    # fused L2 normalize + bf16 cast of the four operands of this step
    img_a = _norm_rows(himg_ref[a]).astype(jnp.bfloat16)
    txt_b = _norm_rows(htxt_ref[b]).astype(jnp.bfloat16)
    img_c = _norm_rows(himg_ref[ca]).astype(jnp.bfloat16)
    txt_c = _norm_rows(htxt_ref[cb]).astype(jnp.bfloat16)

    dn = (((1,), (1,)), ((), ()))
    s_logits = jax.lax.dot_general(img_a, txt_b, dn,
                                   preferred_element_type=jnp.float32)
    s_target = jax.lax.dot_general(img_c, txt_c, dn,
                                   preferred_element_type=jnp.float32)

    # ---- Sinkhorn-Knopp targets (transpose-free, EUP reciprocals) ----
    k_protos = jnp.float32(bsz)                # K
    b_tot = jnp.float32(bsz * world_size)      # B (gathered batch)
    # max-subtraction: mathematically a no-op (cancels in the normalizations),
    # keeps exp() safe even for unnormalized inputs.
    p0 = jnp.exp((s_target - jnp.max(s_target)) * (1.0 / eps))
    p0 = p0 * pl.reciprocal(jnp.sum(p0, keepdims=True))

    t_row = p0   # == sinkhorn_knopp(S_c)        : rows sum to 1
    t_col = p0   # == sinkhorn_knopp(S_c.T).T    : cols sum to 1
    for it in range(sk_iters):                 # static unroll (sk_iters = 3)
        last = (it + 1 == sk_iters)
        # T_row: (col-norm, /K) then (row-norm, /B); final /B cancels with *B.
        t_row = t_row * pl.reciprocal(
            jnp.sum(t_row, axis=0, keepdims=True) * k_protos, approx=True)
        rs = jnp.sum(t_row, axis=1, keepdims=True)
        t_row = t_row * pl.reciprocal(rs if last else rs * b_tot, approx=True)
        # T_col: (row-norm, /K) then (col-norm, /B); final /B cancels with *B.
        t_col = t_col * pl.reciprocal(
            jnp.sum(t_col, axis=1, keepdims=True) * k_protos, approx=True)
        cs = jnp.sum(t_col, axis=0, keepdims=True)
        t_col = t_col * pl.reciprocal(cs if last else cs * b_tot, approx=True)

    # ---- scaled logits: CLIP CE/acc (both directions) + SwALIP soft CE ----
    logits = s_logits * scale
    ce_r, ce_c, acc_r, acc_c, logp_r, logp_c = _bidir_ce_acc(logits)
    sw_img = -jnp.sum(t_row * logp_r) * inv_b
    sw_txt = -jnp.sum(t_col * logp_c) * inv_b

    # one lane-dense (1,1,8,128) store of the per-pair scalars
    vals = (ce_r, ce_c, acc_r, acc_c, sw_img, sw_txt)
    rows = jax.lax.broadcasted_iota(jnp.int32, (_OUT_ROWS, _OUT_LANES), 0)
    out = jnp.zeros((_OUT_ROWS, _OUT_LANES), jnp.float32)
    for k, v in enumerate(vals):
        out = jnp.where(rows == k, v, out)
    out_ref[...] = out[None, None]


# -----------------------------------------------------------------------------
# Pallas wrappers
# -----------------------------------------------------------------------------
def _global_clip(z_img, z_txt, logit_scale):
    out = pl.pallas_call(
        _global_clip_kernel,
        in_specs=[pl.BlockSpec(memory_space=_SMEM),
                  pl.BlockSpec(memory_space=_VMEM),
                  pl.BlockSpec(memory_space=_VMEM)],
        out_specs=pl.BlockSpec(memory_space=_SMEM),
        out_shape=jax.ShapeDtypeStruct((4,), jnp.float32),
    )(logit_scale, z_img, z_txt)
    return out[0], out[1], out[2], out[3]


def _local_pairs(h_img, h_txt, h_logit_scale, *, sk_iters, eps, world_size=1):
    num_augs, bsz, d_img = h_img.shape
    _, _, d_txt = h_txt.shape
    kernel = functools.partial(_local_pairs_kernel, sk_iters=sk_iters,
                               eps=eps, world_size=world_size)
    # TODO(synk): whole-array VMEM blocks assume small B; production batch
    # sizes would need a row-tiled grid + online softmax / blocked Sinkhorn.
    return pl.pallas_call(
        kernel,
        grid=(num_augs, num_augs),
        in_specs=[
            pl.BlockSpec(memory_space=_SMEM),                       # h_logit_scale
            pl.BlockSpec((num_augs, bsz, d_img), lambda a, b: (0, 0, 0)),
            pl.BlockSpec((num_augs, bsz, d_txt), lambda a, b: (0, 0, 0)),
        ],
        out_specs=pl.BlockSpec((1, 1, _OUT_ROWS, _OUT_LANES),
                               lambda a, b: (a, b, 0, 0)),
        out_shape=jax.ShapeDtypeStruct(
            (num_augs, num_augs, _OUT_ROWS, _OUT_LANES), jnp.float32),
        compiler_params=pltpu.CompilerParams(
            dimension_semantics=("parallel", "parallel")),  # 2 TCs on v7x
    )(h_logit_scale, h_img, h_txt)


# -----------------------------------------------------------------------------
# SwALIPLoss forward (scalar glue in plain JAX around the 2 Pallas launches)
# -----------------------------------------------------------------------------
def swalip_loss_forward(outputs, *, loss_avg_or_sum="avg", label_smoothing=0.0,
                        sk_iters=3, target_epsilon=0.05, swalip_weight=0.2):
    assert label_smoothing == 0.0
    z_image_global = outputs["z_image_global"]
    z_text_global = outputs["z_text_global"]
    h_image_local = outputs["h_image_local"]
    h_text_local = outputs["h_text_local"]
    logit_scale = outputs["logit_scale"]        # shape (1,)
    h_logit_scale = outputs["h_logit_scale"]    # shape (1,)

    num_augs = len(h_image_local)
    assert num_augs == len(h_text_local) == 2   # SwALIP forward hardcodes 2 augs

    h_img = jnp.stack(h_image_local)            # (2, B, Dh)
    h_txt = jnp.stack(h_text_local)             # (2, B, Dh)

    # ---- launch 1: global CLIP loss / accuracy (both directions) ----
    (clip_loss_image_global, clip_loss_text_global,
     clip_acc_image_global, clip_acc_text_global) = _global_clip(
         z_image_global, z_text_global, logit_scale)

    # ---- launch 2: all local-pair CLIP + SwALIP work ----
    local = _local_pairs(h_img, h_txt, h_logit_scale,
                         sk_iters=sk_iters, eps=target_epsilon, world_size=1)
    clip_loss_image_local = jnp.mean(local[:, :, 0, 0])
    clip_loss_text_local = jnp.mean(local[:, :, 1, 0])
    clip_acc_image_local = jnp.mean(local[:, :, 2, 0])
    clip_acc_text_local = jnp.mean(local[:, :, 3, 0])
    swalip_loss = jnp.sum(
        (local[:, :, 4, 0] + local[:, :, 5, 0]) * 0.5) / (num_augs ** 2)

    # ---- scalar combination (matches reference) ----
    clip_loss_image = (clip_loss_image_global
                       + clip_loss_image_local * num_augs) / (1 + num_augs)
    clip_loss_text = (clip_loss_text_global
                      + clip_loss_text_local * num_augs) / (1 + num_augs)
    clip_loss = (clip_loss_image + clip_loss_text) / 2
    clip_part = clip_loss * (2.0 if loss_avg_or_sum == "sum" else 1.0)

    loss = swalip_weight * swalip_loss + clip_part

    return {
        "loss": loss,
        "swalip_loss": swalip_loss,
        "clip_loss": clip_loss,
        "clip_loss_image": clip_loss_image,
        "clip_loss_text": clip_loss_text,
        "clip_loss_image_global": clip_loss_image_global,
        "clip_loss_text_global": clip_loss_text_global,
        "clip_loss_image_local": clip_loss_image_local,
        "clip_loss_text_local": clip_loss_text_local,
        "clip_acc": clip_acc_image_global,
        "clip_acc_image_global": clip_acc_image_global,
        "clip_acc_text_global": clip_acc_text_global,
        "clip_acc_image_local": clip_acc_image_local,
        "clip_acc_text_local": clip_acc_text_local,
        "h_logit_scale": h_logit_scale[0],
    }


# -----------------------------------------------------------------------------
if __name__ == "__main__":
    key = jax.random.PRNGKey(0)
    B, D, Dh, NUM_AUGS = 8, 32, 32, 2

    ks = jax.random.split(key, 2 + 2 * NUM_AUGS)
    z_image_global = jax.random.normal(ks[0], (B, D), jnp.float32)
    z_text_global = jax.random.normal(ks[1], (B, D), jnp.float32)
    h_image_local = [jax.random.normal(ks[2 + i], (B, Dh), jnp.float32)
                     for i in range(NUM_AUGS)]
    h_text_local = [jax.random.normal(ks[2 + NUM_AUGS + i], (B, Dh), jnp.float32)
                    for i in range(NUM_AUGS)]

    # deterministic "learned" temperatures (CLIP init: 1/0.07)
    logit_scale = jnp.array([1.0 / 0.07], jnp.float32)
    h_logit_scale = jnp.array([10.0], jnp.float32)

    outputs = {
        "z_image_global": z_image_global,
        "z_text_global": z_text_global,
        "h_image_local": h_image_local,
        "h_text_local": h_text_local,
        "logit_scale": logit_scale,
        "h_logit_scale": h_logit_scale,
    }

    result = swalip_loss_forward(outputs, loss_avg_or_sum="avg",
                                 label_smoothing=0.0, sk_iters=3,
                                 target_epsilon=0.05, swalip_weight=0.2)
    result = jax.tree_util.tree_map(jax.block_until_ready, result)
    print("KERNEL_OK")
</pallas_src>

<mosaic_0001>
module attributes {stable_mosaic.version = 11 : i64} {
  func.func @_global_clip_kernel(%arg0: memref<1xf32, #tpu.memory_space<smem>>, %arg1: memref<8x32xf32, #tpu.memory_space<vmem>>, %arg2: memref<8x32xf32, #tpu.memory_space<vmem>>, %arg3: memref<4xf32, #tpu.memory_space<smem>>) attributes {dimension_semantics = [], scalar_prefetch = 0 : i64, scratch_operands = 0 : i64, tpu.core_type = #tpu.core_type<tc>} {
    %c0 = arith.constant 0 : index
    %0 = memref.load %arg0[%c0] : memref<1xf32, #tpu.memory_space<smem>>
    %c0_0 = arith.constant 0 : index
    %c0_1 = arith.constant 0 : index
    %1 = vector.load %arg1[%c0_0, %c0_1] : memref<8x32xf32, #tpu.memory_space<vmem>>, vector<8x32xf32>
    %2 = arith.mulf %1, %1 : vector<8x32xf32>
    %cst = arith.constant dense<0.000000e+00> : vector<8xf32>
    %3 = vector.multi_reduction <add>, %2, %cst [1] : vector<8x32xf32> to vector<8xf32>
    %4 = vector.shape_cast %3 : vector<8xf32> to vector<8x1xf32>
    %5 = math.rsqrt %4 : vector<8x1xf32>
    %cst_2 = arith.constant 9.99999995E+11 : f32
    %6 = vector.broadcast %cst_2 : f32 to vector<8x1xf32>
    %7 = arith.minimumf %5, %6 : vector<8x1xf32>
    %8 = vector.broadcast %7 : vector<8x1xf32> to vector<8x32xf32>
    %9 = arith.mulf %1, %8 : vector<8x32xf32>
    %10 = arith.truncf %9 : vector<8x32xf32> to vector<8x32xbf16>
    %c0_3 = arith.constant 0 : index
    %c0_4 = arith.constant 0 : index
    %11 = vector.load %arg2[%c0_3, %c0_4] : memref<8x32xf32, #tpu.memory_space<vmem>>, vector<8x32xf32>
    %12 = arith.mulf %11, %11 : vector<8x32xf32>
    %cst_5 = arith.constant dense<0.000000e+00> : vector<8xf32>
    %13 = vector.multi_reduction <add>, %12, %cst_5 [1] : vector<8x32xf32> to vector<8xf32>
    %14 = vector.shape_cast %13 : vector<8xf32> to vector<8x1xf32>
    %15 = math.rsqrt %14 : vector<8x1xf32>
    %cst_6 = arith.constant 9.99999995E+11 : f32
    %16 = vector.broadcast %cst_6 : f32 to vector<8x1xf32>
    %17 = arith.minimumf %15, %16 : vector<8x1xf32>
    %18 = vector.broadcast %17 : vector<8x1xf32> to vector<8x32xf32>
    %19 = arith.mulf %11, %18 : vector<8x32xf32>
    %20 = arith.truncf %19 : vector<8x32xf32> to vector<8x32xbf16>
    %cst_7 = arith.constant dense<0.000000e+00> : vector<8x8xf32>
    %21 = tpu.matmul %10, %20, %cst_7 {dimension_numbers = #tpu.dot_dimension_numbers<[1], [1], [0], [0], [0, 0, 1, 0], [], []>} : vector<8x32xbf16>, vector<8x32xbf16>, vector<8x8xf32> -> vector<8x8xf32>
    %22 = vector.broadcast %0 : f32 to vector<8x8xf32>
    %23 = arith.mulf %22, %21 : vector<8x8xf32>
    %24 = tpu.iota {dimensions = array<i32: 0>} : vector<8x8xi32>
    %25 = tpu.iota {dimensions = array<i32: 1>} : vector<8x8xi32>
    %26 = arith.cmpi eq, %24, %25 : vector<8x8xi32>
    %cst_8 = arith.constant 0.000000e+00 : f32
    %27 = vector.broadcast %cst_8 : f32 to vector<8x8xf32>
    %28 = arith.select %26, %23, %27 : vector<8x8xi1>, vector<8x8xf32>
    %29 = vector.shape_cast %28 : vector<8x8xf32> to vector<1x8x8xf32>
    %cst_9 = arith.constant dense<0.000000e+00> : vector<1xf32>
    %30 = vector.multi_reduction <add>, %29, %cst_9 [1, 2] : vector<1x8x8xf32> to vector<1xf32>
    %31 = vector.shape_cast %30 : vector<1xf32> to vector<1x1x1xf32>
    %32 = vector.extract %31[0, 0, 0] : f32 from vector<1x1x1xf32>
    %cst_10 = arith.constant dense<0xFF800000> : vector<8xf32>
    %33 = vector.multi_reduction <maximumf>, %23, %cst_10 [1] : vector<8x8xf32> to vector<8xf32>
    %34 = vector.shape_cast %33 : vector<8xf32> to vector<8x1xf32>
    %35 = vector.broadcast %34 : vector<8x1xf32> to vector<8x8xf32>
    %36 = arith.subf %23, %35 : vector<8x8xf32>
    %37 = math.exp %36 : vector<8x8xf32>
    %cst_11 = arith.constant dense<0.000000e+00> : vector<8xf32>
    %38 = vector.multi_reduction <add>, %37, %cst_11 [1] : vector<8x8xf32> to vector<8xf32>
    %39 = vector.shape_cast %38 : vector<8xf32> to vector<8x1xf32>
    %40 = math.log %39 : vector<8x1xf32>
    %41 = arith.addf %34, %40 : vector<8x1xf32>
    %cst_12 = arith.constant dense<0xFF800000> : vector<8xf32>
    %42 = vector.multi_reduction <maximumf>, %23, %cst_12 [0] : vector<8x8xf32> to vector<8xf32>
    %43 = vector.shape_cast %42 : vector<8xf32> to vector<1x8xf32>
    %44 = vector.broadcast %43 : vector<1x8xf32> to vector<8x8xf32>
    %45 = arith.subf %23, %44 : vector<8x8xf32>
    %46 = math.exp %45 : vector<8x8xf32>
    %cst_13 = arith.constant dense<0.000000e+00> : vector<8xf32>
    %47 = vector.multi_reduction <add>, %46, %cst_13 [0] : vector<8x8xf32> to vector<8xf32>
    %48 = vector.shape_cast %47 : vector<8xf32> to vector<1x8xf32>
    %49 = math.log %48 : vector<1x8xf32>
    %50 = arith.addf %43, %49 : vector<1x8xf32>
    %51 = vector.shape_cast %41 : vector<8x1xf32> to vector<1x8x1xf32>
    %cst_14 = arith.constant dense<0.000000e+00> : vector<1xf32>
    %52 = vector.multi_reduction <add>, %51, %cst_14 [1, 2] : vector<1x8x1xf32> to vector<1xf32>
    %53 = vector.shape_cast %52 : vector<1xf32> to vector<1x1x1xf32>
    %54 = vector.extract %53[0, 0, 0] : f32 from vector<1x1x1xf32>
    %55 = arith.subf %54, %32 : f32
    %cst_15 = arith.constant 1.250000e-01 : f32
    %56 = arith.mulf %55, %cst_15 : f32
    %57 = vector.shape_cast %50 : vector<1x8xf32> to vector<1x1x8xf32>
    %cst_16 = arith.constant dense<0.000000e+00> : vector<1xf32>
    %58 = vector.multi_reduction <add>, %57, %cst_16 [1, 2] : vector<1x1x8xf32> to vector<1xf32>
    %59 = vector.shape_cast %58 : vector<1xf32> to vector<1x1x1xf32>
    %60 = vector.extract %59[0, 0, 0] : f32 from vector<1x1x1xf32>
    %61 = arith.subf %60, %32 : f32
    %cst_17 = arith.constant 1.250000e-01 : f32
    %62 = arith.mulf %61, %cst_17 : f32
    %63 = vector.broadcast %34 : vector<8x1xf32> to vector<8x8xf32>
    %64 = arith.cmpf oeq, %23, %63 : vector<8x8xf32>
    %c8_i32 = arith.constant 8 : i32
    %65 = vector.broadcast %c8_i32 : i32 to vector<8x8xi32>
    %66 = arith.select %64, %25, %65 : vector<8x8xi1>, vector<8x8xi32>
    %cst_18 = arith.constant dense<2147483647> : vector<8xi32>
    %67 = vector.multi_reduction <minsi>, %66, %cst_18 [1] : vector<8x8xi32> to vector<8xi32>
    %68 = vector.shape_cast %67 : vector<8xi32> to vector<8x1xi32>
    %69 = vector.extract_strided_slice %24 {offsets = [0, 0], sizes = [8, 1], strides = [1, 1]} : vector<8x8xi32> to vector<8x1xi32>
    %70 = arith.cmpi eq, %68, %69 : vector<8x1xi32>
    %71 = arith.extui %70 : vector<8x1xi1> to vector<8x1xi32>
    %72 = arith.sitofp %71 : vector<8x1xi32> to vector<8x1xf32>
    %73 = vector.shape_cast %72 : vector<8x1xf32> to vector<1x8x1xf32>
    %cst_19 = arith.constant dense<0.000000e+00> : vector<1xf32>
    %74 = vector.multi_reduction <add>, %73, %cst_19 [1, 2] : vector<1x8x1xf32> to vector<1xf32>
    %75 = vector.shape_cast %74 : vector<1xf32> to vector<1x1x1xf32>
    %76 = vector.extract %75[0, 0, 0] : f32 from vector<1x1x1xf32>
    %cst_20 = arith.constant 1.000000e+02 : f32
    %77 = arith.mulf %cst_20, %76 : f32
    %cst_21 = arith.constant 1.250000e-01 : f32
    %78 = arith.mulf %77, %cst_21 : f32
    %79 = vector.broadcast %43 : vector<1x8xf32> to vector<8x8xf32>
    %80 = arith.cmpf oeq, %23, %79 : vector<8x8xf32>
    %c8_i32_22 = arith.constant 8 : i32
    %81 = vector.broadcast %c8_i32_22 : i32 to vector<8x8xi32>
    %82 = arith.select %80, %24, %81 : vector<8x8xi1>, vector<8x8xi32>
    %cst_23 = arith.constant dense<2147483647> : vector<8xi32>
    %83 = vector.multi_reduction <minsi>, %82, %cst_23 [0] : vector<8x8xi32> to vector<8xi32>
    %84 = vector.shape_cast %83 : vector<8xi32> to vector<1x8xi32>
    %85 = vector.extract_strided_slice %25 {offsets = [0, 0], sizes = [1, 8], strides = [1, 1]} : vector<8x8xi32> to vector<1x8xi32>
    %86 = arith.cmpi eq, %84, %85 : vector<1x8xi32>
    %87 = arith.extui %86 : vector<1x8xi1> to vector<1x8xi32>
    %88 = arith.sitofp %87 : vector<1x8xi32> to vector<1x8xf32>
    %89 = vector.shape_cast %88 : vector<1x8xf32> to vector<1x1x8xf32>
    %cst_24 = arith.constant dense<0.000000e+00> : vector<1xf32>
    %90 = vector.multi_reduction <add>, %89, %cst_24 [1, 2] : vector<1x1x8xf32> to vector<1xf32>
    %91 = vector.shape_cast %90 : vector<1xf32> to vector<1x1x1xf32>
    %92 = vector.extract %91[0, 0, 0] : f32 from vector<1x1x1xf32>
    %cst_25 = arith.constant 1.000000e+02 : f32
    %93 = arith.mulf %cst_25, %92 : f32
    %cst_26 = arith.constant 1.250000e-01 : f32
    %94 = arith.mulf %93, %cst_26 : f32
    %c0_27 = arith.constant 0 : index
    %95 = memref.load %arg3[%c0_27] : memref<4xf32, #tpu.memory_space<smem>>
    memref.store %56, %arg3[%c0_27] : memref<4xf32, #tpu.memory_space<smem>>
    %c1 = arith.constant 1 : index
    %96 = memref.load %arg3[%c1] : memref<4xf32, #tpu.memory_space<smem>>
    memref.store %62, %arg3[%c1] : memref<4xf32, #tpu.memory_space<smem>>
    %c2 = arith.constant 2 : index
    %97 = memref.load %arg3[%c2] : memref<4xf32, #tpu.memory_space<smem>>
    memref.store %78, %arg3[%c2] : memref<4xf32, #tpu.memory_space<smem>>
    %c3 = arith.constant 3 : index
    %98 = memref.load %arg3[%c3] : memref<4xf32, #tpu.memory_space<smem>>
    memref.store %94, %arg3[%c3] : memref<4xf32, #tpu.memory_space<smem>>
    return
  }
}

</mosaic_0001>

<llo_original>
// kernel: tpu_custom_call.1
$region0: #{tpu_custom_call.1}
  #allocation0 [shape = 'u32[]', space=smem, size = 0x4, offset = 0x4, fixed_abs, tag = 'smem constant byte address 0x4 - core index']
  #allocation1 [shape = 'u32[72,128]{1,0:T(1,128)}', space=vmem, size = 0x9000, scoped, tag = 'internal scratch']
  #allocation2 [shape = 'f32[1]{0:T(128)S(6)}', space=smem, size = 0x200, scoped, tag = 'scoped memory for tpu_custom_call.1']
  %s0 = inlined_call_operand.<no memory space> [shape: f32[1], index: 0, kind: input, shape index: {}]
  %s1 = inlined_call_operand.hbm [shape: f32[8,32], index: 1, kind: input, shape index: {}]
  %s2 = inlined_call_operand.hbm [shape: f32[8,32], index: 2, kind: input, shape index: {}]
  %s3 = inlined_call_operand.hbm [shape: f32[4], index: 3, kind: output, shape index: {}]
  %s4 = sld [smem:[#allocation0]]
  $region30: #{tpu_custom_call.1} parent=0
    _
  %s6 = ssub.s32 1, %s4
  %s7 = scalar_select 0, %s6, %s4
  %8 = sst [smem:[#allocation2]] %s0
  $region1: #{tpu_custom_call.1} parent=0
    #allocation3 [shape = 'u8[4096]{0}', space=vmem, size = 0x1000, scoped, tag = 'input window, operand 1, single buffered']
    #allocation4 [shape = 's32[1]{0}', space=sflag, size = 0x4, scoped, tag = 'scoped memory for tpu_custom_call.1']
    #allocation5 [shape = 's32[1]{0}', space=sflag, size = 0x4, scoped, tag = 'scoped memory for tpu_custom_call.1']
    #allocation6 [shape = 'u8[4096]{0}', space=vmem, size = 0x1000, scoped, tag = 'input window, operand 2, single buffered']
    #allocation7 [shape = 's32[1]{0}', space=sflag, size = 0x4, scoped, tag = 'scoped memory for tpu_custom_call.1']
    #allocation8 [shape = 'u8[512]{0}', space=smem, size = 0x200, scoped, tag = 'output window, operand 0, single buffered']
    %9 = vsyncpa [#allocation4], 0
    %10 = vsyncpa [#allocation7], 0
    %11 = vsyncpa [#allocation5], 0
    // Predicated region
    $region2: #{tpu_custom_call.1} parent=1 // pred_check
      _
    $region3: #{tpu_custom_call.1} parent=1 // pred_check_branch
      %13 = sbr.rel (0) target = $region5
    $region4: #{tpu_custom_call.1} parent=1 // pred_region
      _
    $region5: #{tpu_custom_call.1} parent=1 // pred_fallthru
      _
    // Predicated region
    $region6: #{tpu_custom_call.1} parent=1 // pred_check
      _
    $region7: #{tpu_custom_call.1} parent=1 // pred_check_branch
      %15 = sbr.rel (0) target = $region9
    $region8: #{tpu_custom_call.1} parent=1 // pred_region
      %17 = vsyncadd [#allocation4], 0
      %s19 = sshll.u32 %s1, 4
      %s20 = int_to_ptr.hbm [resolvable:$true] %s19
      %s21 = sshll.u32 [#allocation3], 4
      %s22 = int_to_ptr.vmem [resolvable:$true] %s21
      %24 = dma.hbm_to_vmem [thread:$0]  %s20, 128, %s22, [#allocation4]
    $region9: #{tpu_custom_call.1} parent=1 // pred_fallthru
      _
    // Predicated region
    $region10: #{tpu_custom_call.1} parent=1 // pred_check
      _
    $region11: #{tpu_custom_call.1} parent=1 // pred_check_branch
      %26 = sbr.rel (0) target = $region13
    $region12: #{tpu_custom_call.1} parent=1 // pred_region
      %28 = vsyncadd [#allocation7], 0
      %s30 = sshll.u32 %s2, 4
      %s31 = int_to_ptr.hbm [resolvable:$true] %s30
      %s32 = sshll.u32 [#allocation6], 4
      %s33 = int_to_ptr.vmem [resolvable:$true] %s32
      %35 = dma.hbm_to_vmem [thread:$0]  %s31, 128, %s33, [#allocation7]
    $region13: #{tpu_custom_call.1} parent=1 // pred_fallthru
      _
    // Predicated region
    $region14: #{tpu_custom_call.1} parent=1 // pred_check
      _
    $region15: #{tpu_custom_call.1} parent=1 // pred_check_branch
      %37 = sbr.rel (0) target = $region17
    $region16: #{tpu_custom_call.1} parent=1 // pred_region
      %39 = dma.done [#allocation4], 128
    $region17: #{tpu_custom_call.1} parent=1 // pred_fallthru
      _
    // Predicated region
    $region18: #{tpu_custom_call.1} parent=1 // pred_check
      _
    $region19: #{tpu_custom_call.1} parent=1 // pred_check_branch
      %41 = sbr.rel (0) target = $region21
    $region20: #{tpu_custom_call.1} parent=1 // pred_region
      %43 = dma.done [#allocation7], 128
    $region21: #{tpu_custom_call.1} parent=1 // pred_fallthru
      _
    %s45 = sld [smem:[#allocation2]]
    %v46 = vld [vmem:[#allocation3] sm:$0xff]
    %v47 = vmul.f32 %v46, %v46
    %vm48 = vcmask 261120
    %v49 = vsel %vm48, %v47, 0.0
    %50 = vadd.xlane.f32.xlu0 %v49
    %v51 = vpop.xlane.xlu0 %50
    %v52 = vrsqrt.pop %v51
    %v53 = vmul.f32 %v52, %v51
    %v54 = vmul.f32 %v53, %v52
    %v55 = vmul.f32 0.5, %v54
    %v56 = vsub.f32 1.5, %v55
    %v57 = vmul.f32 %v52, %v56
    %vm58 = vweird.f32 %v51
    %vm59 = vweird.f32 %v52
    %vm60 = vmor %vm58, %vm59
    %v61 = vsel %vm60, %v52, %v57
    %v62 = vmin.f32 %v61, 1e+12
    %v63 = vmul.f32 %v46, %v62
    %v64 = vpack.c.bf16 %v63, %v63
    %v65 = vld [vmem:[#allocation6] sm:$0xff]
    %v66 = vmul.f32 %v65, %v65
    %v67 = vsel %vm48, %v66, 0.0
    %68 = vadd.xlane.f32.xlu0 %v67
    %v69 = vpop.xlane.xlu0 %68
    %v70 = vrsqrt.pop %v69
    %v71 = vmul.f32 %v70, %v69
    %v72 = vmul.f32 %v71, %v70
    %v73 = vmul.f32 0.5, %v72
    %v74 = vsub.f32 1.5, %v73
    %v75 = vmul.f32 %v70, %v74
    %vm76 = vweird.f32 %v69
    %vm77 = vweird.f32 %v70
    %vm78 = vmor %vm76, %vm77
    %v79 = vsel %vm78, %v70, %v75
    %v80 = vmin.f32 %v79, 1e+12
    %v81 = vmul.f32 %v65, %v80
    %v82 = vpack.c.bf16 %v81, %v81
    %v84 = vsel %vm48, %v64, 0
    %v87 = vsel %vm48, %v82, 0
    %89 = vmatpush.bf16.xpose.msra.mxu0 0
    %90 = vmatpush.bf16.xpose.msra.mxu0 0
    %91 = vmatpush.bf16.xpose.msra.mxu0 0
    %92 = vmatpush.bf16.xpose.msra.mxu0 0
    %93 = vmatpush.bf16.xpose.msra.mxu0 0
    %94 = vmatpush.bf16.xpose.msra.mxu0 0
    %95 = vmatpush.bf16.xpose.msra.mxu0 0
    %96 = vmatpush.bf16.xpose.msra.mxu0 %v87
    %97 = vmatmul.bf16.gmra.mxu0 %v84
    %v98 = vpop.f32.mrf.mxu0
    %v99 = vadd.f32 0.0, %v98
    %v100 = vpop.f32.mrf.mxu0
    %101 = vdwg.mxu0
    %v102 = vstv %s45
    %v103 = vmul.f32 %v102, %v99
    %v104 = vlaneseq
    %v105 = vshrl.u32 %v104, 7
    %v106 = vlaneseq
    %v107 = vand.u32 %v106, 127
    %vm108 = vcmp.eq.s32.totalorder %v105, %v107
    %v109 = vsel %vm108, %v103, 0.0
    %vm110 = vcmask 64512
    %v111 = vsel %vm110, %v109, 0.0
    %112 = vadd.xlane.f32.xlu0 %v111
    %v113 = vpop.xlane.xlu0 %112
    %v114 = vrot.slane %v113, 4
    %v115 = vadd.f32 %v113, %v114
    %v116 = vrot.slane %v115, 2
    %v117 = vadd.f32 %v115, %v116
    %v118 = vrot.slane %v117, 1
    %v119 = vadd.f32 %v117, %v118
    %s120 = vtos %v119
    %v121 = vsel %vm110, %v103, -inf
    %122 = vmax.xlane.f32.xlu0 %v121
    %v123 = vpop.xlane.xlu0 %122
    %v124 = vsub.f32 %v103, %v123
    %v125 = vmul.f32 %v124, 1.442695
    %v126 = vpow.pop %v125
    %v127 = vsel %vm110, %v126, 0.0
    %128 = vadd.xlane.f32.xlu0 %v127
    %v129 = vpop.xlane.xlu0 %128
    %v130 = vlog2.pop %v129
    %v131 = vmul.f32 %v130, 0.6931472
    %v132 = vadd.f32 %v123, %v131
    %v133 = vrot.slane %v121, 4
    %v134 = vmax.f32 %v121, %v133
    %v135 = vrot.slane %v134, 2
    %v136 = vmax.f32 %v134, %v135
    %v137 = vrot.slane %v136, 1
    %v138 = vmax.f32 %v136, %v137
    %v139 = vsub.f32 %v103, %v138
    %v140 = vmul.f32 %v139, 1.442695
    %v141 = vpow.pop %v140
    %v142 = vsel %vm110, %v141, 0.0
    %v143 = vrot.slane %v142, 4
    %v144 = vadd.f32 %v142, %v143
    %v145 = vrot.slane %v144, 2
    %v146 = vadd.f32 %v144, %v145
    %v147 = vrot.slane %v146, 1
    %v148 = vadd.f32 %v146, %v147
    %v149 = vlog2.pop %v148
    %v150 = vmul.f32 %v149, 0.6931472
    %v151 = vadd.f32 %v138, %v150
    %vm152 = vcmask 7168
    %v153 = vsel %vm152, %v132, 0.0
    %154 = vadd.xlane.f32.xlu0 %v153
    %v155 = vpop.xlane.xlu0 %154
    %v156 = vrot.slane %v155, 4
    %v157 = vadd.f32 %v155, %v156
    %v158 = vrot.slane %v157, 2
    %v159 = vadd.f32 %v157, %v158
    %v160 = vrot.slane %v159, 1
    %v161 = vadd.f32 %v159, %v160
    %s162 = vtos %v161
    %s163 = ssub.f32 %s162, %s120
    %s164 = smul.f32 %s163, 0.125
    %vm165 = vcmask 57344
    %v166 = vsel %vm165, %v151, 0.0
    %167 = vadd.xlane.f32.xlu0 %v166
    %v168 = vpop.xlane.xlu0 %167
    %v169 = vrot.slane %v168, 4
    %v170 = vadd.f32 %v168, %v169
    %v171 = vrot.slane %v170, 2
    %v172 = vadd.f32 %v170, %v171
    %v173 = vrot.slane %v172, 1
    %v174 = vadd.f32 %v172, %v173
    %s175 = vtos %v174
    %s176 = ssub.f32 %s175, %s120
    %s177 = smul.f32 %s176, 0.125
    %vm178 = vcmp.eq.f32.partialorder %v103, %v123
    %v179 = vsel %vm178, %v107, 8
    %v180 = vsel %vm110, %v179, 2147483647
    %v181 = vand.u32 %v180, 65535
    %v182 = vshra.s32 %v180, 16
    %v183 = vcvt.s32.f32 %v181
    %v184 = vcvt.s32.f32 %v182
    %185 = vmin.xlane.f32.xlu0 %v184
    %v186 = vpop.xlane.xlu0 %185
    %vm187 = vcmp.eq.f32.partialorder %v184, %v186
    %v188 = vsel %vm187, %v183, inf
    %189 = vmin.xlane.f32.xlu0 %v188
    %v190 = vpop.xlane.xlu0 %189
    %v191 = vcvt.f32.s32 %v190
    %v192 = vcvt.f32.s32 %v186
    %v193 = vshll.u32 %v192, 16
    %v194 = vadd.s32 %v193, %v191
    %vm195 = vcmp.eq.s32.totalorder %v194, %v105
    %v196 = vsel %vm195, 1, 0
    %v197 = vcvt.s32.f32 %v196
    %v198 = vsel %vm152, %v197, 0.0
    %199 = vadd.xlane.f32.xlu0 %v198
    %v200 = vpop.xlane.xlu0 %199
    %v201 = vrot.slane %v200, 4
    %v202 = vadd.f32 %v200, %v201
    %v203 = vrot.slane %v202, 2
    %v204 = vadd.f32 %v202, %v203
    %v205 = vrot.slane %v204, 1
    %v206 = vadd.f32 %v204, %v205
    %s207 = vtos %v206
    %s208 = smul.f32 %s207, 100.0
    %s209 = smul.f32 %s208, 0.125
    %vm210 = vcmp.eq.f32.partialorder %v103, %v138
    %v211 = vsel %vm210, %v105, 8
    %v212 = vsel %vm110, %v211, 2147483647
    %v213 = vrot.slane %v212, 4
    %vm214 = vcmp.lt.s32.totalorder %v212, %v213
    %v215 = vsel %vm214, %v212, %v213
    %v216 = vrot.slane %v215, 2
    %vm217 = vcmp.lt.s32.totalorder %v215, %v216
    %v218 = vsel %vm217, %v215, %v216
    %v219 = vrot.slane %v218, 1
    %vm220 = vcmp.lt.s32.totalorder %v218, %v219
    %v221 = vsel %vm220, %v218, %v219
    %vm222 = vcmp.eq.s32.totalorder %v221, %v107
    %v223 = vsel %vm222, 1, 0
    %v224 = vcvt.s32.f32 %v223
    %v225 = vsel %vm165, %v224, 0.0
    %226 = vadd.xlane.f32.xlu0 %v225
    %v227 = vpop.xlane.xlu0 %226
    %v228 = vrot.slane %v227, 4
    %v229 = vadd.f32 %v227, %v228
    %v230 = vrot.slane %v229, 2
    %v231 = vadd.f32 %v229, %v230
    %v232 = vrot.slane %v231, 1
    %v233 = vadd.f32 %v231, %v232
    %s234 = vtos %v233
    %s235 = smul.f32 %s234, 100.0
    %s236 = smul.f32 %s235, 0.125
    %s237 = scalar_lea.smem [#allocation8], 0
    %238 = sst [smem:[%s237]] %s164
    %s239 = scalar_lea.smem [#allocation8], 1
    %240 = sst [smem:[%s239]] %s177
    %s241 = scalar_lea.smem [#allocation8], 2
    %242 = sst [smem:[%s241]] %s209
    %s243 = scalar_lea.smem [#allocation8], 3
    %244 = sst [smem:[%s243]] %s236
    // Predicated region
    $region22: #{tpu_custom_call.1} parent=1 // pred_check
      _
    $region23: #{tpu_custom_call.1} parent=1 // pred_check_branch
      %246 = sbr.rel (0) target = $region25
    $region24: #{tpu_custom_call.1} parent=1 // pred_region
      %248 = vsyncadd [#allocation5], 0
      %s250 = sshll.u32 %s3, 4
      %s251 = int_to_ptr.hbm [resolvable:$true] %s250
      %253 = dma.smem_to_hbm [#allocation8], 16, %s251, [#allocation5]
    $region25: #{tpu_custom_call.1} parent=1 // pred_fallthru
      _
    // Predicated region
    $region26: #{tpu_custom_call.1} parent=1 // pred_check
      _
    $region27: #{tpu_custom_call.1} parent=1 // pred_check_branch
      %255 = sbr.rel (0) target = $region29
    $region28: #{tpu_custom_call.1} parent=1 // pred_region
      %257 = dma.done [#allocation5], 16
    $region29: #{tpu_custom_call.1} parent=1 // pred_fallthru
      _
    %258 = sfence
    %259 = vsyncpa [#allocation4], 1
    %260 = vsyncpa [#allocation7], 1
    %261 = vsyncpa [#allocation5], 1

</llo_original>
